<compile_context>
chip_gen: v5e
topology: v5e:2x2
jax: 0.10.0
libtpu: 0.0.40
codegen_flags: <defaults>
</compile_context>

<pallas_src>
import functools

import jax
import jax.numpy as jnp
from jax.experimental import pallas as pl
from jax.experimental.pallas import tpu as pltpu

ALPHA = 0.05      # leaky_relu_coef
BN_EPS = 1e-5
LANE = 128        # lane width for lane-dense outputs


def _leaky(x, alpha):
    return jnp.where(x > 0, x, alpha * x)


def _round_up(x, m):
    return ((x + m - 1) // m) * m


# ---------------------------------------------------------------------------
# Kernel 1: ln0 (Linear in_dim -> 3*d0) + leaky_relu -> packed partial BN stats
# (no activation output: activations are recomputed in kernel 2, removing the
#  largest HBM stream of the previous version)
# ---------------------------------------------------------------------------
def _ln0_stats_kernel(z_ref, w0_ref, b0_ref, stats_ref, *, alpha, d0, tile_m,
                      n_valid, stats_w):
    # bf16 operands, f32 accumulation on the MXU
    y = jnp.dot(z_ref[...], w0_ref[...], preferred_element_type=jnp.float32)
    y = _leaky(y + b0_ref[...], alpha)                       # (tile_m, 3*d0) f32

    # mask padded rows out of the statistics
    row = jax.lax.broadcasted_iota(jnp.int32, (tile_m, 1), 0) + pl.program_id(0) * tile_m
    valid = row < n_valid

    # per-column partial sums (folding of the 3 d0-wide groups happens outside,
    # on tiny (3*d0,) vectors, so no unaligned lane slices on the big tile here)
    col_sum = jnp.sum(jnp.where(valid, y, 0.0), axis=0, keepdims=True)       # (1, 3*d0)
    col_sq = jnp.sum(jnp.where(valid, y * y, 0.0), axis=0, keepdims=True)    # (1, 3*d0)

    parts = [col_sum, col_sq]
    pad_w = stats_w - 6 * d0
    if pad_w:
        parts.append(jnp.zeros((1, pad_w), jnp.float32))
    stats_ref[...] = jnp.concatenate(parts, axis=1).reshape(1, 1, stats_w)


# ---------------------------------------------------------------------------
# Kernel 2: ln0 recompute + bn0 (folded scale/shift) + leaky
#           + 3x LinkLayer via block-structured weights (no sublane concats)
#           + edge_prob mix matmul + softmax (EUP reciprocal) + 1e-4
# ---------------------------------------------------------------------------
def _fused_front_kernel(z_ref, w0_ref, b0_ref, sc_ref, sh_ref,
                        w1b_ref, b1b_ref, w2b_ref, b2b_ref, mix_ref,
                        xs_ref, ep_ref, *, alpha, tile_m):
    # ln0: identical bf16 operands as kernel 1 -> bit-identical f32 activations
    y = jnp.dot(z_ref[...], w0_ref[...], preferred_element_type=jnp.float32)
    y = _leaky(y + b0_ref[...], alpha)                       # (tile_m, 3*d0) f32

    # BatchNorm (scale/shift pre-folded outside) + leaky, f32 epilogue math
    x = _leaky(y * sc_ref[...] + sh_ref[...], alpha)         # (tile_m, 3*d0) f32
    xs_ref[...] = x.astype(xs_ref.dtype)                     # bf16 store (halved HBM stream)

    # LinkLayer on pairs (x0,x1),(x1,x2),(x0,x2): block-structured weights keep
    # everything lane-axis with K = 3*d0 (no row-stacking / sublane concats).
    xb = x.astype(jnp.bfloat16)
    h = jnp.dot(xb, w1b_ref[...], preferred_element_type=jnp.float32) + b1b_ref[...]
    h = _leaky(h, alpha)                                      # (tile_m, 3*d0) f32
    a = jnp.dot(h.astype(jnp.bfloat16), w2b_ref[...],
                preferred_element_type=jnp.float32) + b2b_ref[...]
    a = _leaky(a, alpha)                                      # (tile_m, 128); cols 0..5 = a1|a2|a3

    # fixed 6->4 averaging as one constant mix matmul (lane-dense, MXU is idle)
    logits = jnp.dot(a.astype(jnp.bfloat16), mix_ref[...],
                     preferred_element_type=jnp.float32)      # (tile_m, 128); cols 0..3 valid

    # softmax over the 4 valid lanes (padded lanes pushed to -inf-ish) + 1e-4
    lane = jax.lax.broadcasted_iota(jnp.int32, logits.shape, 1)
    logits = jnp.where(lane < 4, logits, -1e30)
    mx = jnp.max(logits, axis=1, keepdims=True)
    e = jnp.exp(logits - mx)
    p = e * pl.reciprocal(jnp.sum(e, axis=1, keepdims=True), approx=True) + 1e-4
    ep_ref[...] = p.astype(ep_ref.dtype)                      # bf16 lane-dense slab


# ---------------------------------------------------------------------------
# Deterministic parameter init (synthetic, shapes from RGULGenerator.__init__)
# ---------------------------------------------------------------------------
def init_params(key, in_dim, initial_dim):
    k = jax.random.split(key, 8)
    scale = 0.1
    return {
        "initial_dim": initial_dim,
        # ln0: Linear(in_dim, 3 * initial_dim)
        "ln0_w": scale * jax.random.normal(k[0], (in_dim, 3 * initial_dim), jnp.float32),
        "ln0_b": scale * jax.random.normal(k[1], (3 * initial_dim,), jnp.float32),
        # bn0: BatchNorm1d(initial_dim) default affine init
        "bn0_g": jnp.ones((initial_dim,), jnp.float32),
        "bn0_b": jnp.zeros((initial_dim,), jnp.float32),
        # LinkLayer (assumed): concat(2*d) -> d -> 2
        "link_w1": scale * jax.random.normal(k[2], (2 * initial_dim, initial_dim), jnp.float32),
        "link_b1": scale * jax.random.normal(k[3], (initial_dim,), jnp.float32),
        "link_w2": scale * jax.random.normal(k[4], (initial_dim, 2), jnp.float32),
        "link_b2": scale * jax.random.normal(k[5], (2,), jnp.float32),
    }


def prepare_params(params):
    """Pre-cast matmul operands to bf16 and build the block-structured weights:

      W1_block (3*d0, 3*d0): column block p is the pairwise first layer for
        pair p, i.e.   h_all = [x0|x1|x2] @ W1_block == [h(x0,x1)|h(x1,x2)|h(x0,x2)]
      W2_block (3*d0, 128): block-diagonal second layer, lane-padded to 128
      mix      (128, 128):  constant 6->4 edge_prob averaging matrix
    """
    d0 = params["initial_dim"]
    w1a = params["link_w1"][:d0, :]
    w1b = params["link_w1"][d0:, :]
    zd = jnp.zeros((d0, d0), jnp.float32)
    # pair (x0,x1): rows0=W1a rows1=W1b ; pair (x1,x2): rows1=W1a rows2=W1b ;
    # pair (x0,x2): rows0=W1a rows2=W1b
    col_p0 = jnp.concatenate([w1a, w1b, zd], axis=0)
    col_p1 = jnp.concatenate([zd, w1a, w1b], axis=0)
    col_p2 = jnp.concatenate([w1a, zd, w1b], axis=0)
    w1_block = jnp.concatenate([col_p0, col_p1, col_p2], axis=1)          # (3*d0, 3*d0)
    b1_block = jnp.tile(params["link_b1"], 3).reshape(1, 3 * d0)

    w2 = params["link_w2"]                                                # (d0, 2)
    w2_block = jnp.zeros((3 * d0, LANE), jnp.float32)
    w2_block = w2_block.at[0:d0, 0:2].set(w2)
    w2_block = w2_block.at[d0:2 * d0, 2:4].set(w2)
    w2_block = w2_block.at[2 * d0:3 * d0, 4:6].set(w2)
    b2_block = jnp.zeros((1, LANE), jnp.float32).at[0, 0:6].set(jnp.tile(params["link_b2"], 3))

    # edge_prob mixing: a_all cols are [a1_0,a1_1, a2_0,a2_1, a3_0,a3_1]
    #   c0=(a1_0+a2_1+a3_1)/3  c1=(a2_0+a1_1+a3_1)/3
    #   c2=(a3_0+a2_1+a1_1)/3  c3=(a1_1+a2_1+a3_1)/3
    mix = jnp.zeros((LANE, LANE), jnp.float32)
    rows = jnp.array([0, 3, 5, 1, 2, 5, 1, 3, 4, 1, 3, 5])
    cols = jnp.array([0, 0, 0, 1, 1, 1, 2, 2, 2, 3, 3, 3])
    mix = mix.at[rows, cols].set(1.0 / 3.0)

    p = dict(params)
    p["ln0_w_bf16"] = params["ln0_w"].astype(jnp.bfloat16)
    p["ln0_b_row"] = params["ln0_b"].reshape(1, 3 * d0)
    p["w1_block_bf16"] = w1_block.astype(jnp.bfloat16)
    p["b1_block"] = b1_block
    p["w2_block_bf16"] = w2_block.astype(jnp.bfloat16)
    p["b2_block"] = b2_block
    p["mix_bf16"] = mix.astype(jnp.bfloat16)
    return p


def _choose_tiling(n, tile_m_max):
    rows = _round_up(max(n, 1), 8)
    tile = min(tile_m_max, rows)
    # v7x megacore: make sure the "parallel" grid axis has >= 2 steps when
    # there are enough rows (both TensorCores get work); no effect on v5e/v6e.
    if rows // tile < 2 and rows >= 16:
        tile = _round_up((rows + 1) // 2, 8)
    padded = _round_up(rows, tile)
    return tile, padded


# ---------------------------------------------------------------------------
# Forward (front end of RGULGenerator.forward)
# ---------------------------------------------------------------------------
def rgul_generator_front(z, params, sample_key, *, tile_m_max=1024):
    n, in_dim = z.shape
    d0 = params["initial_dim"]
    d3 = 3 * d0

    tile_m, padded_n = _choose_tiling(n, tile_m_max)
    grid = (padded_n // tile_m,)
    stats_w = _round_up(6 * d0, LANE)

    # pad with jnp.pad (no extra zeros().at[].set() HBM pass)
    z_p = jnp.pad(z.astype(jnp.bfloat16), ((0, padded_n - n), (0, 0)))

    # ---- Kernel 1: ln0 + leaky -> packed per-tile BN partial statistics ------
    stats = pl.pallas_call(
        functools.partial(_ln0_stats_kernel, alpha=ALPHA, d0=d0, tile_m=tile_m,
                          n_valid=n, stats_w=stats_w),
        out_shape=jax.ShapeDtypeStruct((grid[0], 1, stats_w), jnp.float32),
        grid=grid,
        in_specs=[
            pl.BlockSpec((tile_m, in_dim), lambda i: (i, 0)),
            pl.BlockSpec((in_dim, d3), lambda i: (0, 0)),   # weights stay resident
            pl.BlockSpec((1, d3), lambda i: (0, 0)),
        ],
        out_specs=pl.BlockSpec((1, 1, stats_w), lambda i: (i, 0, 0)),
        compiler_params=pltpu.CompilerParams(dimension_semantics=("parallel",)),
    )(z_p, params["ln0_w_bf16"], params["ln0_b_row"])

    # ---- tiny JAX glue: reduce partial stats, fold BN affine -----------------
    # (stats are f32; one-pass E[x^2]-E[x]^2 — see note re: cancellation)
    col_sum = jnp.sum(stats[:, 0, 0:d3], axis=0)
    col_sq = jnp.sum(stats[:, 0, d3:2 * d3], axis=0)
    total = jnp.float32(3 * n)
    mean = (col_sum[:d0] + col_sum[d0:2 * d0] + col_sum[2 * d0:]) / total
    var = jnp.maximum((col_sq[:d0] + col_sq[d0:2 * d0] + col_sq[2 * d0:]) / total
                      - mean * mean, 0.0)                   # biased (PyTorch BN train mode)
    scale = params["bn0_g"] * jax.lax.rsqrt(var + BN_EPS)
    shift = params["bn0_b"] - mean * scale
    scale3 = jnp.tile(scale, 3).reshape(1, d3)
    shift3 = jnp.tile(shift, 3).reshape(1, d3)

    # ---- Kernel 2: ln0 recompute + BN + leaky + LinkLayers + edge_prob -------
    xs_out, edge_p = pl.pallas_call(
        functools.partial(_fused_front_kernel, alpha=ALPHA, tile_m=tile_m),
        out_shape=(
            jax.ShapeDtypeStruct((padded_n, d3), jnp.bfloat16),
            jax.ShapeDtypeStruct((padded_n, LANE), jnp.bfloat16),
        ),
        grid=grid,
        in_specs=[
            pl.BlockSpec((tile_m, in_dim), lambda i: (i, 0)),
            pl.BlockSpec((in_dim, d3), lambda i: (0, 0)),
            pl.BlockSpec((1, d3), lambda i: (0, 0)),
            pl.BlockSpec((1, d3), lambda i: (0, 0)),
            pl.BlockSpec((1, d3), lambda i: (0, 0)),
            pl.BlockSpec((d3, d3), lambda i: (0, 0)),
            pl.BlockSpec((1, d3), lambda i: (0, 0)),
            pl.BlockSpec((d3, LANE), lambda i: (0, 0)),
            pl.BlockSpec((1, LANE), lambda i: (0, 0)),
            pl.BlockSpec((LANE, LANE), lambda i: (0, 0)),
        ],
        out_specs=(
            pl.BlockSpec((tile_m, d3), lambda i: (i, 0)),
            pl.BlockSpec((tile_m, LANE), lambda i: (i, 0)),
        ),
        compiler_params=pltpu.CompilerParams(dimension_semantics=("parallel",)),
    )(z_p, params["ln0_w_bf16"], params["ln0_b_row"], scale3, shift3,
      params["w1_block_bf16"], params["b1_block"],
      params["w2_block_bf16"], params["b2_block"], params["mix_bf16"])

    # (n, 3*d0) -> (3n, d0) view (contiguous), drop row / lane padding
    xs = xs_out.reshape(3 * padded_n, d0)[: 3 * n]            # bf16 node features
    edge_prob = edge_p[:n, :4].astype(jnp.float32)

    # Categorical(edge_prob).sample() / log_prob()  [plain JAX glue; not a hot path]
    p = edge_prob / jnp.sum(edge_prob, axis=1, keepdims=True)
    edge0_links = jax.random.categorical(sample_key, jnp.log(p), axis=-1)
    prob_init_edge = jnp.log(jnp.take_along_axis(p, edge0_links[:, None], axis=1))[:, 0]

    # TODO(synk): dynamic edge_index construction, EdgeAttrConstruct, to_undirected,
    # NNConv stack, UnpoolLayerEZ, skip-z assembly, final_node_layers and
    # Batch/Data packaging are not reproducible with static-shape Pallas kernels /
    # provided source; we return the computed front-end tensors instead.
    return xs, edge_prob, edge0_links, prob_init_edge


# ---------------------------------------------------------------------------
if __name__ == "__main__":
    n, in_dim, initial_dim = 20, 16, 32   # n=20 exercises a 2-step grid + row padding

    key = jax.random.PRNGKey(0)
    z_key, p_key, s_key = jax.random.split(key, 3)

    z = jax.random.normal(z_key, (n, in_dim), jnp.float32)
    params = prepare_params(init_params(p_key, in_dim, initial_dim))

    xs, edge_prob, edge0_links, prob_init_edge = rgul_generator_front(z, params, s_key)
    jax.block_until_ready((xs, edge_prob, edge0_links, prob_init_edge))

    assert xs.shape == (3 * n, initial_dim)
    assert edge_prob.shape == (n, 4)
    assert edge0_links.shape == (n,)
    assert prob_init_edge.shape == (n,)
    assert bool(jnp.all(jnp.isfinite(xs.astype(jnp.float32))))
    assert bool(jnp.all(edge_prob > 0))
    assert bool(jnp.all(jnp.isfinite(prob_init_edge)))
    print("KERNEL_OK")
</pallas_src>

<mosaic_0001>
module attributes {stable_mosaic.version = 11 : i64} {
  func.func @_ln0_stats_kernel(%arg0: i32, %arg1: memref<16x16xbf16, #tpu.memory_space<vmem>>, %arg2: memref<16x96xbf16, #tpu.memory_space<vmem>>, %arg3: memref<1x96xf32, #tpu.memory_space<vmem>>, %arg4: memref<1x1x256xf32, #tpu.memory_space<vmem>>) attributes {dimension_semantics = [#tpu.dimension_semantics<parallel>], iteration_bounds = array<i64: 2>, scalar_prefetch = 0 : i64, scratch_operands = 0 : i64, tpu.core_type = #tpu.core_type<tc>, window_params = [{transform_indices = @transform_0, window_bounds = array<i64: 16, 16>}, {pipeline_mode = #tpu.pipeline_mode<synchronous>, transform_indices = @transform_1, window_bounds = array<i64: 16, 96>}, {pipeline_mode = #tpu.pipeline_mode<synchronous>, transform_indices = @transform_2, window_bounds = array<i64: 1, 96>}, {transform_indices = @transform_3, window_bounds = array<i64: 1, 1, 256>}]} {
    %c0 = arith.constant 0 : index
    %c0_0 = arith.constant 0 : index
    %0 = vector.load %arg1[%c0, %c0_0] : memref<16x16xbf16, #tpu.memory_space<vmem>>, vector<16x16xbf16>
    %c0_1 = arith.constant 0 : index
    %c0_2 = arith.constant 0 : index
    %1 = vector.load %arg2[%c0_1, %c0_2] : memref<16x96xbf16, #tpu.memory_space<vmem>>, vector<16x96xbf16>
    %cst = arith.constant dense<0.000000e+00> : vector<16x96xf32>
    %2 = tpu.matmul %0, %1, %cst {dimension_numbers = #tpu.dot_dimension_numbers<[1], [0], [0], [1], [0, 0, 1, 1], [], []>} : vector<16x16xbf16>, vector<16x96xbf16>, vector<16x96xf32> -> vector<16x96xf32>
    %c0_3 = arith.constant 0 : index
    %c0_4 = arith.constant 0 : index
    %3 = vector.load %arg3[%c0_3, %c0_4] : memref<1x96xf32, #tpu.memory_space<vmem>>, vector<1x96xf32>
    %4 = vector.broadcast %3 : vector<1x96xf32> to vector<16x96xf32>
    %5 = arith.addf %2, %4 : vector<16x96xf32>
    %cst_5 = arith.constant 0.000000e+00 : f32
    %6 = vector.broadcast %cst_5 : f32 to vector<16x96xf32>
    %7 = arith.cmpf ogt, %5, %6 : vector<16x96xf32>
    %cst_6 = arith.constant 5.000000e-02 : f32
    %8 = vector.broadcast %cst_6 : f32 to vector<16x96xf32>
    %9 = arith.mulf %8, %5 : vector<16x96xf32>
    %10 = arith.select %7, %5, %9 : vector<16x96xi1>, vector<16x96xf32>
    %11 = tpu.iota {dimensions = array<i32: 0>} : vector<16x1xi32>
    %c16_i32 = arith.constant 16 : i32
    %12 = arith.muli %arg0, %c16_i32 : i32
    %13 = vector.broadcast %12 : i32 to vector<16x1xi32>
    %14 = arith.addi %11, %13 : vector<16x1xi32>
    %c20_i32 = arith.constant 20 : i32
    %15 = vector.broadcast %c20_i32 : i32 to vector<16x1xi32>
    %16 = arith.cmpi slt, %14, %15 : vector<16x1xi32>
    %cst_7 = arith.constant 0.000000e+00 : f32
    %17 = vector.shape_cast %16 : vector<16x1xi1> to vector<16x1xi1>
    %18 = vector.broadcast %17 : vector<16x1xi1> to vector<16x96xi1>
    %19 = vector.broadcast %cst_7 : f32 to vector<16x96xf32>
    %20 = arith.select %18, %10, %19 : vector<16x96xi1>, vector<16x96xf32>
    %cst_8 = arith.constant dense<0.000000e+00> : vector<96xf32>
    %21 = vector.multi_reduction <add>, %20, %cst_8 [0] : vector<16x96xf32> to vector<96xf32>
    %22 = vector.shape_cast %21 : vector<96xf32> to vector<1x96xf32>
    %23 = arith.mulf %10, %10 : vector<16x96xf32>
    %cst_9 = arith.constant 0.000000e+00 : f32
    %24 = vector.shape_cast %16 : vector<16x1xi1> to vector<16x1xi1>
    %25 = vector.broadcast %24 : vector<16x1xi1> to vector<16x96xi1>
    %26 = vector.broadcast %cst_9 : f32 to vector<16x96xf32>
    %27 = arith.select %25, %23, %26 : vector<16x96xi1>, vector<16x96xf32>
    %cst_10 = arith.constant dense<0.000000e+00> : vector<96xf32>
    %28 = vector.multi_reduction <add>, %27, %cst_10 [0] : vector<16x96xf32> to vector<96xf32>
    %29 = vector.shape_cast %28 : vector<96xf32> to vector<1x96xf32>
    %cst_11 = arith.constant 0.000000e+00 : f32
    %30 = vector.broadcast %cst_11 : f32 to vector<1x64xf32>
    %31 = tpu.concatenate %22, %29, %30 in 1 : vector<1x96xf32>, vector<1x96xf32>, vector<1x64xf32> -> vector<1x256xf32>
    %32 = vector.shape_cast %31 : vector<1x256xf32> to vector<1x1x256xf32>
    %c0_12 = arith.constant 0 : index
    %c0_13 = arith.constant 0 : index
    %c0_14 = arith.constant 0 : index
    %33 = vector.load %arg4[%c0_12, %c0_13, %c0_14] : memref<1x1x256xf32, #tpu.memory_space<vmem>>, vector<1x1x256xf32>
    tpu.vector_store %arg4[%c0_12, %c0_13, %c0_14], %32 {strides = array<i32>} : memref<1x1x256xf32, #tpu.memory_space<vmem>>, vector<1x1x256xf32>,
    return
  }
  func.func @transform_0(%arg0: i32) -> (i32, i32) {
    %c0_i32 = arith.constant 0 : i32
    %c0_i32_0 = arith.constant 0 : i32
    return %arg0, %c0_i32 : i32, i32
  }
  func.func @transform_1(%arg0: i32) -> (i32, i32) {
    %c0_i32 = arith.constant 0 : i32
    %c0_i32_0 = arith.constant 0 : i32
    %c0_i32_1 = arith.constant 0 : i32
    return %c0_i32, %c0_i32_0 : i32, i32
  }
  func.func @transform_2(%arg0: i32) -> (i32, i32) {
    %c0_i32 = arith.constant 0 : i32
    %c0_i32_0 = arith.constant 0 : i32
    %c0_i32_1 = arith.constant 0 : i32
    return %c0_i32, %c0_i32_0 : i32, i32
  }
  func.func @transform_3(%arg0: i32) -> (i32, i32, i32) {
    %c0_i32 = arith.constant 0 : i32
    %c0_i32_0 = arith.constant 0 : i32
    %c0_i32_1 = arith.constant 0 : i32
    return %arg0, %c0_i32, %c0_i32_0 : i32, i32, i32
  }
}

</mosaic_0001>

<llo_original>
// kernel: tpu_custom_call.1
$region0: #{tpu_custom_call.1}
  #allocation0 [shape = 'u32[]', space=smem, size = 0x4, offset = 0x4, fixed_abs, tag = 'smem constant byte address 0x4 - core index']
  #allocation1 [shape = 'u32[72,128]{1,0:T(1,128)}', space=vmem, size = 0x9000, scoped, tag = 'internal scratch']
  %s0 = inlined_call_operand.vmem [shape: bf16[32,16], index: 0, kind: input, shape index: {}]
  %s1 = inlined_call_operand.vmem [shape: bf16[16,96], index: 1, kind: input, shape index: {}]
  %s2 = inlined_call_operand.vmem [shape: f32[1,96], index: 2, kind: input, shape index: {}]
  %s3 = inlined_call_operand.hbm [shape: f32[2,1,256], index: 3, kind: output, shape index: {}]
  %s4 = sld [smem:[#allocation0]]
  $region45: #{tpu_custom_call.1} parent=0
    _
  %s6 = ssub.s32 1, %s4
  %s7 = scalar_select 0, %s6, %s4
  $region1: #{tpu_custom_call.1} parent=0
    #allocation2 [shape = 'u8[2048]{0}', space=vmem, size = 0x800, scoped, tag = 'output window, operand 0']
    #allocation3 [shape = 's32[2]{0}', space=sflag, size = 0x8, scoped, tag = 'scoped memory for tpu_custom_call.1']
    %8 = vsyncpa [#allocation3], 0
    %s9 = scalar_lea.sflag [#allocation3], 1
    %10 = vsyncpa %s9, 0
    loop: start=0, step=1, limit=4
    $region2: #{tpu_custom_call.1} parent=1 // loop_pre_header
      _
    $region3: #{tpu_custom_call.1} parent=1 // loop_header
      %s12 = sphi 0, %s16
      %p13 = scmp.ge.s32.totalorder %s12, 4
      %s22 = sphi 0, %s24
      %s25 = sphi 0, %s22
      %s26 = sphi 0, %s25
      %s42 = sphi 0, %s26
      %s46 = sphi 0, %s46
      %s48 = sphi 0, %s46
      %s49 = sphi 0, %s48
      %s63 = sphi 0, %s49
      %s67 = sphi 0, %s67
      %s69 = sphi 0, %s67
      %s70 = sphi 0, %s69
      %s84 = sphi 0, %s70
      %s90 = sphi 0, %s92
      %s93 = sphi 0, %s90
      %s94 = sphi 0, %s93
      %s110 = sphi 0, %s94
    $region4: #{tpu_custom_call.1} parent=1 // loop_header_branch
      %15 = sbr.rel (%p13) target = $region8
    $region5: #{tpu_custom_call.1} parent=1 // loop_body
      %s17 = ssub.s32 %s12, 1
      %s18 = ssub.s32 %s12, 2
      %s19 = sadd.s32 %s12, 1
      %s20 = ssub.s32 %s12, %s19
      %p21 = scmp.eq.s32.totalorder %s20, 0
      %s23 = sadd.s32 %s22, 1
      %s24 = scalar_select %p21, %s22, %s23
      %p27 = pneg %p21
      %p28 = scmp.eq.s32.totalorder %s12, 1
      %p29 = por %p27, %p28
      %p30 = scmp.ne.s32.totalorder %s22, %s25
      %p31 = scmp.eq.s32.totalorder %s12, 0
      %p32 = por %p30, %p31
      %p33 = scmp.ne.s32.totalorder %s22, %s25
      %p34 = scmp.eq.s32.totalorder %s17, 1
      %p35 = por %p33, %p34
      %p36 = scmp.ne.s32.totalorder %s25, %s26
      %p37 = scmp.eq.s32.totalorder %s17, 0
      %p38 = por %p36, %p37
      %p39 = scmp.ne.s32.totalorder %s25, %s26
      %p40 = scmp.eq.s32.totalorder %s18, 1
      %p41 = por %p39, %p40
      %p43 = scmp.ne.s32.totalorder %s26, %s42
      %p44 = scmp.eq.s32.totalorder %s18, 0
      %p45 = por %p43, %p44
      %s47 = sadd.s32 %s46, 1
      %p50 = scmp.eq.s32.totalorder %s12, 1
      %p51 = scmp.ne.s32.totalorder %s46, %s48
      %p52 = scmp.eq.s32.totalorder %s12, 0
      %p53 = por %p51, %p52
      %p54 = scmp.ne.s32.totalorder %s46, %s48
      %p55 = scmp.eq.s32.totalorder %s17, 1
      %p56 = por %p54, %p55
      %p57 = scmp.ne.s32.totalorder %s48, %s49
      %p58 = scmp.eq.s32.totalorder %s17, 0
      %p59 = por %p57, %p58
      %p60 = scmp.ne.s32.totalorder %s48, %s49
      %p61 = scmp.eq.s32.totalorder %s18, 1
      %p62 = por %p60, %p61
      %p64 = scmp.ne.s32.totalorder %s49, %s63
      %p65 = scmp.eq.s32.totalorder %s18, 0
      %p66 = por %p64, %p65
      %s68 = sadd.s32 %s67, 1
      %p71 = scmp.eq.s32.totalorder %s12, 1
      %p72 = scmp.ne.s32.totalorder %s67, %s69
      %p73 = scmp.eq.s32.totalorder %s12, 0
      %p74 = por %p72, %p73
      %p75 = scmp.ne.s32.totalorder %s67, %s69
      %p76 = scmp.eq.s32.totalorder %s17, 1
      %p77 = por %p75, %p76
      %p78 = scmp.ne.s32.totalorder %s69, %s70
      %p79 = scmp.eq.s32.totalorder %s17, 0
      %p80 = por %p78, %p79
      %p81 = scmp.ne.s32.totalorder %s69, %s70
      %p82 = scmp.eq.s32.totalorder %s18, 1
      %p83 = por %p81, %p82
      %p85 = scmp.ne.s32.totalorder %s70, %s84
      %p86 = scmp.eq.s32.totalorder %s18, 0
      %p87 = por %p85, %p86
      %s88 = ssub.s32 %s12, %s19
      %p89 = scmp.eq.s32.totalorder %s88, 0
      %s91 = sadd.s32 %s90, 1
      %s92 = scalar_select %p89, %s90, %s91
      %p95 = pneg %p89
      %p96 = scmp.eq.s32.totalorder %s12, 1
      %p97 = por %p95, %p96
      %p98 = scmp.ne.s32.totalorder %s90, %s93
      %p99 = scmp.eq.s32.totalorder %s12, 0
      %p100 = por %p98, %p99
      %p101 = scmp.ne.s32.totalorder %s90, %s93
      %p102 = scmp.eq.s32.totalorder %s17, 1
      %p103 = por %p101, %p102
      %p104 = scmp.ne.s32.totalorder %s93, %s94
      %p105 = scmp.eq.s32.totalorder %s17, 0
      %p106 = por %p104, %p105
      %p107 = scmp.ne.s32.totalorder %s93, %s94
      %p108 = scmp.eq.s32.totalorder %s18, 1
      %p109 = por %p107, %p108
      %p111 = scmp.ne.s32.totalorder %s94, %s110
      %p112 = scmp.eq.s32.totalorder %s18, 0
      %p113 = por %p111, %p112
      %p114 = scmp.le.s32.totalorder 1, %s12
      %p115 = scmp.lt.s32.totalorder %s12, 3
      %p116 = pnand %p114, %p115
      %p117 = pneg %p116
      // Predicated region
      $region9: #{tpu_custom_call.1} parent=5 // pred_check
        _
      $region10: #{tpu_custom_call.1} parent=5 // pred_check_branch
        %119 = sbr.rel (%p116) target = $region12
      $region11: #{tpu_custom_call.1} parent=5 // pred_region
        %s120 = ssub.s32 %s12, 1
        // Predicated region
        $region13: #{tpu_custom_call.1} parent=11 // pred_check
          %p121 = pneg %p59
        $region14: #{tpu_custom_call.1} parent=11 // pred_check_branch
          %123 = sbr.rel (%p121) target = $region16
        $region15: #{tpu_custom_call.1} parent=11 // pred_region
          _
        $region16: #{tpu_custom_call.1} parent=11 // pred_fallthru
          _
        // Predicated region
        $region17: #{tpu_custom_call.1} parent=11 // pred_check
          %p124 = pneg %p80
        $region18: #{tpu_custom_call.1} parent=11 // pred_check_branch
          %126 = sbr.rel (%p124) target = $region20
        $region19: #{tpu_custom_call.1} parent=11 // pred_region
          _
        $region20: #{tpu_custom_call.1} parent=11 // pred_fallthru
          _
      $region12: #{tpu_custom_call.1} parent=5 // pred_fallthru
        _
      %p127 = scmp.lt.s32.totalorder %s12, 2
      // Predicated region
      $region21: #{tpu_custom_call.1} parent=5 // pred_check
        %p128 = pneg %p127
      $region22: #{tpu_custom_call.1} parent=5 // pred_check_branch
        %130 = sbr.rel (%p128) target = $region24
      $region23: #{tpu_custom_call.1} parent=5 // pred_region
        // Predicated region
        $region25: #{tpu_custom_call.1} parent=23 // pred_check
          %p131 = pneg %p32
        $region26: #{tpu_custom_call.1} parent=23 // pred_check_branch
          %133 = sbr.rel (%p131) target = $region28
        $region27: #{tpu_custom_call.1} parent=23 // pred_region
          %s134 = smul.u32 2, %s12
          %p135 = scmp.lt.s32.totalorder %s134, 3
          %s136 = scalar_select %p135, %s134, 3
          %s137 = smul.addr %s136, 4
          %s138 = scalar_lea.vmem %s0, %s137
          %s139 = smul.u32 2, %s12
        $region28: #{tpu_custom_call.1} parent=23 // pred_fallthru
          _
      $region24: #{tpu_custom_call.1} parent=5 // pred_fallthru
        _
      %p140 = scmp.le.s32.totalorder 1, %s12
      %p141 = scmp.lt.s32.totalorder %s12, 3
      %p142 = pnand %p140, %p141
      %p143 = pneg %p142
      // Predicated region
      $region29: #{tpu_custom_call.1} parent=5 // pred_check
        _
      $region30: #{tpu_custom_call.1} parent=5 // pred_check_branch
        %145 = sbr.rel (%p142) target = $region32
      $region31: #{tpu_custom_call.1} parent=5 // pred_region
        %s146 = ssub.s32 %s12, 1
        %s147 = smul.u32 2, %s17
        %p148 = scmp.lt.s32.totalorder %s147, 3
        %s149 = scalar_select %p148, %s147, 3
        %s150 = smul.addr %s149, 4
        %s151 = scalar_lea.vmem %s0, %s150
        %p152 = pneg %p38
        %p153 = pneg %p35
        %p154 = pneg %p59
        %p155 = pneg %p56
        %p156 = pneg %p80
        %p157 = pneg %p77
        %p158 = pneg %p106
        %p159 = pneg %p103
        %s160 = sand.u32 %s93, 1
        %s161 = scalar_lea.sflag [#allocation3], %s160
        %s162 = sand.u32 %s93, 1
        %s163 = smul.addr %s162, 2
        %s164 = scalar_lea.vmem [#allocation2], %s163
        %s165 = smul.u32 2, %s17
        %p166 = scmp.lt.s32.totalorder %s165, 3
        %s167 = scalar_select %p166, %s165, 3
        %s168 = smul.addr %s167, 4
        %s169 = scalar_lea.vmem %s0, %s168
        %s170 = smul.u32 2, %s17
        %v172 = vld [vmem:[%s169] sm:$0xf]
        %v173 = vld [vmem:[%s169 + $0x4] sm:$0xf]
        %v174 = vld [vmem:[%s1] sm:$0xf]
        %v175 = vld [vmem:[%s1 + $0x4] sm:$0xf]
        %v176 = vld [vmem:[%s2] sm:$0x1]
        %v178 = vperm.slane %v176, 0
        %v182 = vunpack.c.l.b16 %v172
        %v183 = vunpack.c.l.b16 %v173
        %v184 = vpack.c.b16 %v183, %v182
        %v187 = vunpack.c.l.b16 %v174
        %v188 = vunpack.c.l.b16 %v175
        %v189 = vpack.c.b16 %v188, %v187
        %vm191 = vcmask 130048
        %v193 = vsel %vm191, %v184, 0
        %195 = vmatpush.bf16.msra.mxu0 0
        %196 = vmatpush.bf16.msra.mxu0 0
        %197 = vmatpush.bf16.msra.mxu0 0
        %198 = vmatpush.bf16.msra.mxu0 0
        %199 = vmatpush.bf16.msra.mxu0 0
        %200 = vmatpush.bf16.msra.mxu0 0
        %201 = vmatpush.bf16.msra.mxu0 0
        %202 = vmatpush.bf16.msra.mxu0 %v189
        %203 = vmatmul.bf16.gmra.mxu0 %v193
        %v204 = vpop.f32.mrf.mxu0
        %v205 = vadd.f32 %v178, %v204
        %v206 = vpop.f32.mrf.mxu0
        %v207 = vadd.f32 %v178, %v206
        %208 = vdwg.mxu0
        %vm209 = vcmp.gt.f32.partialorder %v205, 0.0
        %vm210 = vcmp.gt.f32.partialorder %v207, 0.0
        %v211 = vmul.f32 %v205, 0.05
        %v212 = vmul.f32 %v207, 0.05
        %v213 = vsel %vm209, %v205, %v211
        %v214 = vsel %vm210, %v207, %v212
        %v215 = vlaneseq
        %v216 = vshrl.u32 %v215, 7
        %v217 = vadd.s32 %v216, 8
        %s218 = smul.u32 %s17, 16
        %v219 = vstv %s218
        %v220 = vadd.s32 %v216, %v219
        %v221 = vadd.s32 %v217, %v219
        %vm222 = vcmp.lt.s32.totalorder %v220, 20
        %vm223 = vcmp.lt.s32.totalorder %v221, 20
        %v224 = vsel %vm222, 1, 0
        %v225 = vsel %vm223, 1, 0
        %vm226 = vcmp.eq.s32.totalorder %v224, 1
        %vm227 = vcmp.eq.s32.totalorder %v225, 1
        %v228 = vsel %vm226, %v213, 0.0
        %v229 = vsel %vm227, %v214, 0.0
        %vm230 = vcmask 785408
        %v231 = vsel %vm230, %v228, 0.0
        %v232 = vsel %vm230, %v229, 0.0
        %v233 = vadd.f32 %v231, %v232
        %v234 = vrot.slane %v233, 4
        %v235 = vadd.f32 %v233, %v234
        %v236 = vrot.slane %v235, 2
        %v237 = vadd.f32 %v235, %v236
        %v238 = vrot.slane %v237, 1
        %v239 = vadd.f32 %v237, %v238
        %v240 = vmul.f32 %v213, %v213
        %v241 = vmul.f32 %v214, %v214
        %v242 = vsel %vm226, %v240, 0.0
        %v243 = vsel %vm227, %v241, 0.0
        %v244 = vsel %vm230, %v242, 0.0
        %v245 = vsel %vm230, %v243, 0.0
        %v246 = vadd.f32 %v244, %v245
        %v247 = vrot.slane %v246, 4
        %v248 = vadd.f32 %v246, %v247
        %v249 = vrot.slane %v248, 2
        %v250 = vadd.f32 %v248, %v249
        %v251 = vrot.slane %v250, 1
        %v252 = vadd.f32 %v250, %v251
        %254 = vrot.lane.b32.xlu0 %v252, 96
        %v255 = vpop.permute.xlu0 %254
        %v257 = vsel %vm230, %v239, %v255
        %vm258 = vcmask 523264
        %v259 = vsel %vm258, %v255, 0.0
        %v262 = vrot.slane %v259, 7
        %vm263 = vcmask 1040384
        %v264 = vsel %vm263, %v257, %v262
        %v266 = vlaneseq
        %vm267 = vcmp.ge.s32.totalorder %v266, 0
        %vm268 = vcmp.lt.s32.totalorder %v266, 256
        %vm269 = vmand %vm267, %vm268
        %270 = vst.msk [vmem:[%s164] sm:$0x3] %vm269, %v264
        %s271 = sand.u32 %s93, 1
        %s272 = scalar_lea.sflag [#allocation3], %s271
        %s273 = sand.u32 %s93, 1
        %s274 = smul.addr %s273, 2
        %s275 = scalar_lea.vmem [#allocation2], %s274
        // Predicated region
        $region33: #{tpu_custom_call.1} parent=31 // pred_check
          %p276 = pneg %p103
        $region34: #{tpu_custom_call.1} parent=31 // pred_check_branch
          %278 = sbr.rel (%p276) target = $region36
        $region35: #{tpu_custom_call.1} parent=31 // pred_region
          %280 = vsyncadd %s272, 0
          %s281 = smul.addr %s17, 2
          %s282 = scalar_lea.hbm %s3, %s281
          %s284 = sshll.u32 %s275, 4
          %s285 = int_to_ptr.vmem [resolvable:$true] %s284
          %s286 = sshll.u32 %s282, 4
          %s287 = int_to_ptr.hbm [resolvable:$true] %s286
          %289 = dma.vmem_to_hbm [thread:$0]  %s285, 32, %s287, %s272
        $region36: #{tpu_custom_call.1} parent=31 // pred_fallthru
          _
      $region32: #{tpu_custom_call.1} parent=5 // pred_fallthru
        _
      %p290 = scmp.le.s32.totalorder 2, %s12
      // Predicated region
      $region37: #{tpu_custom_call.1} parent=5 // pred_check
        %p291 = pneg %p290
      $region38: #{tpu_custom_call.1} parent=5 // pred_check_branch
        %293 = sbr.rel (%p291) target = $region40
      $region39: #{tpu_custom_call.1} parent=5 // pred_region
        %s294 = ssub.s32 %s12, 2
        // Predicated region
        $region41: #{tpu_custom_call.1} parent=39 // pred_check
          %p295 = pneg %p109
        $region42: #{tpu_custom_call.1} parent=39 // pred_check_branch
          %297 = sbr.rel (%p295) target = $region44
        $region43: #{tpu_custom_call.1} parent=39 // pred_region
          %s298 = sand.u32 %s94, 1
          %s299 = scalar_lea.sflag [#allocation3], %s298
          %s300 = sand.u32 %s94, 1
          %s301 = smul.addr %s300, 2
          %s302 = scalar_lea.vmem [#allocation2], %s301
          %304 = dma.done %s299, 32
        $region44: #{tpu_custom_call.1} parent=39 // pred_fallthru
          _
      $region40: #{tpu_custom_call.1} parent=5 // pred_fallthru
        _
    $region6: #{tpu_custom_call.1} parent=1 // loop_footer
      %s16 = sadd.s32 1, %s12
    $region7: #{tpu_custom_call.1} parent=1 // loop_footer_branch
      %11 = sbr.rel target = $region3
    $region8: #{tpu_custom_call.1} parent=1 // loop_exit
      _
    %305 = vsyncpa [#allocation3], 1
    %s306 = scalar_lea.sflag [#allocation3], 1
    %307 = vsyncpa %s306, 1

</llo_original>
